<compile_context>
chip_gen: v6e
topology: v6e:2x2x1
jax: 0.10.0
libtpu: 0.0.40
codegen_flags: <defaults>
</compile_context>

<pallas_src>
import functools

import jax
import jax.numpy as jnp
from jax.experimental import pallas as pl
from jax.experimental.pallas import tpu as pltpu


def _norm_kernel(x_ref, g_ref, b_ref, o_ref):
    # x_ref/o_ref: (TR, HW) tiles; g_ref/b_ref: (TR, 1) per-row float32 affine params.
    x = x_ref[...].astype(jnp.float32)
    hw = x.shape[-1]
    # Two-pass stats (mean, then centered sum of squares): numerically safer than the
    # single-pass E[x^2]-E[x]^2 form for high-mean / low-variance rows.
    mean = jnp.sum(x, axis=-1, keepdims=True) * (1.0 / hw)                  # (TR, 1)
    diff = x - mean                                                          # x dead after this
    # torch.std() is unbiased -> divide by (HW - 1); eps is added to std (not var),
    # matching the PyTorch module.
    var = jnp.sum(diff * diff, axis=-1, keepdims=True) * (1.0 / (hw - 1))   # (TR, 1)
    inv_std = pl.reciprocal(jnp.sqrt(var) + 1e-5)    # per-row only, exact reciprocal
    # gamma * (x - mean) / (std + eps) + beta  ==  (gamma * inv_std) * diff + beta
    # -> a single per-element mul + add, with only `diff` as the live f32 block temp.
    scale = g_ref[...] * inv_std                                             # (TR, 1)
    o_ref[...] = (scale * diff + b_ref[...]).astype(o_ref.dtype)


def _round_up(x, m):
    return (x + m - 1) // m * m


@functools.lru_cache(maxsize=None)
def _hw_config():
    """Generation-aware VMEM budget / pipeline-depth targets.

    v5e/v6e: 128 MiB VMEM, 1 TensorCore  -> larger blocks, higher vmem limit.
    v7x:      64 MiB VMEM, 2 TensorCores -> smaller blocks, and >= 6 grid steps so
              the 'parallel' axis both shards across the two cores and keeps the
              BlockSpec pipeline double-buffered (>= 2-3 steps) on each core.
    """
    try:
        vmem_cap = getattr(pltpu.get_tpu_info(), "vmem_capacity_bytes", None)
    except Exception:  # query unsupported / interpret mode -> conservative defaults
        vmem_cap = None
    if vmem_cap is not None and vmem_cap >= (100 << 20):   # v5e / v6e class (128 MiB)
        return dict(vmem_limit_bytes=96 << 20, block_budget_bytes=48 << 20, min_grid=3)
    # v7x class (64 MiB physical) or unknown: conservative VMEM, deep grid.
    return dict(vmem_limit_bytes=40 << 20, block_budget_bytes=26 << 20, min_grid=6)


def _pick_tile_rows(nc, hw, itemsize, *, block_budget_bytes, min_grid):
    """Largest row tile whose working set fits `block_budget_bytes`, respecting the
    dtype sublane minimum (8 f32 / 16 bf16 / 32 int8), and shrunk (down to that
    minimum) until the grid has >= min_grid steps so v7x's two TensorCores each get
    a pipelined stream."""
    sub = {4: 8, 2: 16, 1: 32}.get(itemsize, 8)
    # Per-row VMEM: double-buffered in + out blocks (native dtype) + ~2 f32 in-kernel
    # temporaries (upcast x and centered diff) + the lane-padded (TR,1)->(TR,128)
    # gamma/beta blocks (2 params x 2 buffers).
    per_row_bytes = hw * (4 * itemsize + 2 * 4) + 2 * 2 * 128 * 4
    max_rows = max(sub, (block_budget_bytes // per_row_bytes) // sub * sub)
    tile_rows = max(sub, min(max_rows, _round_up(nc, sub)) // sub * sub)
    while tile_rows > sub and pl.cdiv(nc, tile_rows) < min_grid:
        tile_rows = max(sub, (tile_rows // 2) // sub * sub)
    return tile_rows


def spatial_layer_norm(x, gamma, beta):
    """x: (N, C, H, W); gamma/beta: (1, C, 1, 1).
    Computes gamma * (x - mean) / (std + 1e-5) + beta per (n, c) slice over H*W,
    with unbiased std — identical semantics to the PyTorch module."""
    N, C, H, W = x.shape
    NC, HW = N * C, H * W
    # Conservative: a block whose last dim equals the full array dim is also legal for
    # non-multiples (7x7 / 14x14 maps) with lane masking, but it is untested here.
    assert HW % 128 == 0, "H*W must be a multiple of 128 for lane tiling"
    # TODO(synk): for very large H*W (a single min-row block exceeding the VMEM budget)
    #             add a second 'arbitrary' grid axis over HW with pl.when-gated
    #             (sum, sumsq) accumulators; not needed for FreqBlock feature maps.

    cfg = _hw_config()
    itemsize = jnp.dtype(x.dtype).itemsize
    tile_rows = _pick_tile_rows(
        NC, HW, itemsize,
        block_budget_bytes=cfg["block_budget_bytes"], min_grid=cfg["min_grid"])
    grid = pl.cdiv(NC, tile_rows)

    x2 = x.reshape(NC, HW)
    # Per-row (n, c) affine params as (NC, 1), kept in float32 regardless of activation
    # dtype (parameters stay full precision; their HBM traffic is negligible).
    g_rows = jnp.broadcast_to(gamma.reshape(1, C), (N, C)).reshape(NC, 1).astype(jnp.float32)
    b_rows = jnp.broadcast_to(beta.reshape(1, C), (N, C)).reshape(NC, 1).astype(jnp.float32)

    # Advisory cost estimate so XLA can overlap this HBM-bound call with neighbours
    # (the surrounding FreqBlock convs / FFTs).
    cost = pl.CostEstimate(
        flops=6 * NC * HW,
        transcendentals=2 * NC,
        bytes_accessed=2 * NC * HW * itemsize + 2 * NC * 4,
    )

    # No row padding: grid = cdiv(NC, tile_rows). The final partial block reads
    # unspecified rows (harmless — the op is strictly row-wise) and its out-of-bounds
    # writes are masked by Pallas, so the old jnp.pad / out[:NC] full-tensor HBM
    # round-trips are gone.
    out = pl.pallas_call(
        _norm_kernel,
        out_shape=jax.ShapeDtypeStruct((NC, HW), x.dtype),
        grid_spec=pltpu.PrefetchScalarGridSpec(
            num_scalar_prefetch=0,
            grid=(grid,),
            in_specs=[
                pl.BlockSpec((tile_rows, HW), lambda i: (i, 0)),
                pl.BlockSpec((tile_rows, 1), lambda i: (i, 0)),
                pl.BlockSpec((tile_rows, 1), lambda i: (i, 0)),
            ],
            out_specs=pl.BlockSpec((tile_rows, HW), lambda i: (i, 0)),
        ),
        compiler_params=pltpu.CompilerParams(
            # Independent rows -> 'parallel' shards the single row-tile axis across
            # v7x's two TensorCores; min_grid keeps >= 2-3 steps per core so the
            # in/out DMAs stay double-buffered. No-op on single-core v5e/v6e.
            dimension_semantics=("parallel",),
            vmem_limit_bytes=cfg["vmem_limit_bytes"],
        ),
        cost_estimate=cost,
    )(x2, g_rows, b_rows)

    return out.reshape(N, C, H, W)


def _reference(x, gamma, beta):
    xf = x.astype(jnp.float32)
    mean = jnp.mean(xf, axis=(2, 3), keepdims=True)
    var = jnp.sum((xf - mean) ** 2, axis=(2, 3), keepdims=True) / (
        x.shape[2] * x.shape[3] - 1)
    std = jnp.sqrt(var)
    return gamma * (xf - mean) / (std + 1e-5) + beta


if __name__ == "__main__":
    key = jax.random.PRNGKey(0)
    fn = jax.jit(spatial_layer_norm)

    # Main check: small FreqBlock-like shape; parameters at their nn.Parameter init
    # values (ones / zeros).
    N, C, H, W = 2, 4, 16, 16
    x = jax.random.normal(key, (N, C, H, W), dtype=jnp.float32)
    gamma = jnp.ones((1, C, 1, 1), dtype=jnp.float32)
    beta = jnp.zeros((1, C, 1, 1), dtype=jnp.float32)
    out = jax.block_until_ready(fn(x, gamma, beta))
    assert out.shape == (N, C, H, W)
    assert jnp.allclose(out, _reference(x, gamma, beta), atol=1e-5, rtol=1e-5)

    # Second check: NC (=15) not a multiple of the row tile and non-trivial affine
    # params -> exercises the pad-free masked partial last block on hardware.
    k1, k2, k3 = jax.random.split(key, 3)
    N2, C2 = 3, 5
    x2 = jax.random.normal(k1, (N2, C2, H, W), dtype=jnp.float32)
    gamma2 = 0.5 + jax.random.uniform(k2, (1, C2, 1, 1), dtype=jnp.float32)
    beta2 = jax.random.normal(k3, (1, C2, 1, 1), dtype=jnp.float32)
    out2 = jax.block_until_ready(fn(x2, gamma2, beta2))
    assert out2.shape == (N2, C2, H, W)
    assert jnp.allclose(out2, _reference(x2, gamma2, beta2), atol=1e-5, rtol=1e-5)

    print("KERNEL_OK")
</pallas_src>

<mosaic_0001>
module attributes {stable_mosaic.version = 11 : i64} {
  func.func @_norm_kernel(%arg0: i32, %arg1: memref<8x256xf32, #tpu.memory_space<vmem>>, %arg2: memref<8x1xf32, #tpu.memory_space<vmem>>, %arg3: memref<8x1xf32, #tpu.memory_space<vmem>>, %arg4: memref<8x256xf32, #tpu.memory_space<vmem>>) attributes {dimension_semantics = [#tpu.dimension_semantics<parallel>], iteration_bounds = array<i64: 1>, scalar_prefetch = 0 : i64, scratch_operands = 0 : i64, tpu.core_type = #tpu.core_type<tc>, window_params = [{transform_indices = @transform_0, window_bounds = array<i64: 8, 256>}, {transform_indices = @transform_1, window_bounds = array<i64: 8, 1>}, {transform_indices = @transform_2, window_bounds = array<i64: 8, 1>}, {transform_indices = @transform_3, window_bounds = array<i64: 8, 256>}]} {
    %c0 = arith.constant 0 : index
    %c0_0 = arith.constant 0 : index
    %0 = vector.load %arg1[%c0, %c0_0] : memref<8x256xf32, #tpu.memory_space<vmem>>, vector<8x256xf32>
    %cst = arith.constant dense<0.000000e+00> : vector<8xf32>
    %1 = vector.multi_reduction <add>, %0, %cst [1] : vector<8x256xf32> to vector<8xf32>
    %2 = vector.shape_cast %1 : vector<8xf32> to vector<8x1xf32>
    %cst_1 = arith.constant 3.906250e-03 : f32
    %3 = vector.broadcast %cst_1 : f32 to vector<8x1xf32>
    %4 = arith.mulf %2, %3 : vector<8x1xf32>
    %5 = vector.broadcast %4 : vector<8x1xf32> to vector<8x256xf32>
    %6 = arith.subf %0, %5 : vector<8x256xf32>
    %7 = arith.mulf %6, %6 : vector<8x256xf32>
    %cst_2 = arith.constant dense<0.000000e+00> : vector<8xf32>
    %8 = vector.multi_reduction <add>, %7, %cst_2 [1] : vector<8x256xf32> to vector<8xf32>
    %9 = vector.shape_cast %8 : vector<8xf32> to vector<8x1xf32>
    %cst_3 = arith.constant 0.00392156886 : f32
    %10 = vector.broadcast %cst_3 : f32 to vector<8x1xf32>
    %11 = arith.mulf %9, %10 : vector<8x1xf32>
    %12 = math.sqrt %11 : vector<8x1xf32>
    %cst_4 = arith.constant 9.99999974E-6 : f32
    %13 = vector.broadcast %cst_4 : f32 to vector<8x1xf32>
    %14 = arith.addf %12, %13 : vector<8x1xf32>
    %15 = tpu.reciprocal %14 : vector<8x1xf32> -> vector<8x1xf32>
    %c0_5 = arith.constant 0 : index
    %c0_6 = arith.constant 0 : index
    %16 = vector.load %arg2[%c0_5, %c0_6] : memref<8x1xf32, #tpu.memory_space<vmem>>, vector<8x1xf32>
    %17 = arith.mulf %16, %15 : vector<8x1xf32>
    %18 = vector.broadcast %17 : vector<8x1xf32> to vector<8x256xf32>
    %19 = arith.mulf %18, %6 : vector<8x256xf32>
    %c0_7 = arith.constant 0 : index
    %c0_8 = arith.constant 0 : index
    %20 = vector.load %arg3[%c0_7, %c0_8] : memref<8x1xf32, #tpu.memory_space<vmem>>, vector<8x1xf32>
    %21 = vector.broadcast %20 : vector<8x1xf32> to vector<8x256xf32>
    %22 = arith.addf %19, %21 : vector<8x256xf32>
    %c0_9 = arith.constant 0 : index
    %c0_10 = arith.constant 0 : index
    %23 = vector.load %arg4[%c0_9, %c0_10] : memref<8x256xf32, #tpu.memory_space<vmem>>, vector<8x256xf32>
    tpu.vector_store %arg4[%c0_9, %c0_10], %22 {strides = array<i32>} : memref<8x256xf32, #tpu.memory_space<vmem>>, vector<8x256xf32>,
    return
  }
  func.func @transform_0(%arg0: i32) -> (i32, i32) {
    %c0_i32 = arith.constant 0 : i32
    %c0_i32_0 = arith.constant 0 : i32
    return %arg0, %c0_i32 : i32, i32
  }
  func.func @transform_1(%arg0: i32) -> (i32, i32) {
    %c0_i32 = arith.constant 0 : i32
    %c0_i32_0 = arith.constant 0 : i32
    return %arg0, %c0_i32 : i32, i32
  }
  func.func @transform_2(%arg0: i32) -> (i32, i32) {
    %c0_i32 = arith.constant 0 : i32
    %c0_i32_0 = arith.constant 0 : i32
    return %arg0, %c0_i32 : i32, i32
  }
  func.func @transform_3(%arg0: i32) -> (i32, i32) {
    %c0_i32 = arith.constant 0 : i32
    %c0_i32_0 = arith.constant 0 : i32
    return %arg0, %c0_i32 : i32, i32
  }
}

</mosaic_0001>

<llo_original>
// kernel: spatial_layer_norm.1
$region0: #{spatial_layer_norm.1}
  #allocation0 [shape = 'u32[]', space=smem, size = 0x4, offset = 0x4, fixed_abs, tag = 'smem constant byte address 0x4 - core index']
  #allocation1 [shape = 'u32[144,128]{1,0:T(1,128)}', space=vmem, size = 0x12000, scoped, tag = 'internal scratch']
  %s0 = inlined_call_operand.vmem [shape: f32[8,256], index: 0, kind: input, shape index: {}]
  %s1 = inlined_call_operand.vmem [shape: f32[8,1], index: 1, kind: input, shape index: {}]
  %s2 = inlined_call_operand.vmem [shape: f32[8,1], index: 2, kind: input, shape index: {}]
  %s3 = inlined_call_operand.vmem [shape: f32[8,256], index: 3, kind: output, shape index: {}]
  %s4 = sld [smem:[#allocation0]]
  $region22: #{spatial_layer_norm.1} parent=0
    _
  %s6 = ssub.s32 1, %s4
  %s7 = scalar_select 0, %s6, %s4
  // Predicated region
  $region2: #{spatial_layer_norm.1} parent=0 // pred_check
    _
  $region3: #{spatial_layer_norm.1} parent=0 // pred_check_branch
    %9 = sbr.rel (0) target = $region5
  $region4: #{spatial_layer_norm.1} parent=0 // pred_region
    _
  $region5: #{spatial_layer_norm.1} parent=0 // pred_fallthru
    _
  // Predicated region
  $region6: #{spatial_layer_norm.1} parent=0 // pred_check
    _
  $region7: #{spatial_layer_norm.1} parent=0 // pred_check_branch
    %11 = sbr.rel (0) target = $region9
  $region8: #{spatial_layer_norm.1} parent=0 // pred_region
    _
  $region9: #{spatial_layer_norm.1} parent=0 // pred_fallthru
    _
  // Predicated region
  $region10: #{spatial_layer_norm.1} parent=0 // pred_check
    _
  $region11: #{spatial_layer_norm.1} parent=0 // pred_check_branch
    %13 = sbr.rel (0) target = $region13
  $region12: #{spatial_layer_norm.1} parent=0 // pred_region
    _
  $region13: #{spatial_layer_norm.1} parent=0 // pred_fallthru
    _
  %v14 = vld [vmem:[%s0] sm:$0xff]
  %v15 = vld [vmem:[%s0 + $0x8] sm:$0xff]
  %v16 = vadd.f32 %v14, %v15
  %17 = vadd.xlane.f32.xlu0 %v16
  %v18 = vpop.xlane.xlu0 %17
  %v19 = vmul.f32 %v18, 0.00390625
  %v20 = vsub.f32 %v14, %v19
  %v21 = vsub.f32 %v15, %v19
  %v22 = vmul.f32 %v20, %v20
  %v23 = vmul.f32 %v21, %v21
  %v24 = vadd.f32 %v22, %v23
  %25 = vadd.xlane.f32.xlu0 %v24
  %v26 = vpop.xlane.xlu0 %25
  %v27 = vmul.f32 %v26, 0.003921569
  %v28 = vrsqrt.pop %v27
  %v29 = vmul.f32 %v27, %v28
  %vm30 = vcmp.eq.f32.partialorder %v27, inf
  %v31 = vsel %vm30, %v27, %v29
  %vm32 = vcmp.eq.f32.partialorder %v27, 0.0
  %v33 = vand.u32 %v27, 2147483648
  %v34 = vsel %vm32, %v33, %v31
  %v35 = vadd.f32 %v34, 1e-05
  %v36 = vrcp.pop %v35
  %v37 = vld [vmem:[%s1] sm:$0xff]
  %v38 = vmul.f32 %v37, %v36
  %40 = vset.pattern.permute.xlu0 0
  %41 = vperm.xlu0 %40, %v38
  %v42 = vpop.permute.xlu0 %41
  %v44 = vmul.f32 %v42, %v20
  %v45 = vmul.f32 %v42, %v21
  %v46 = vld [vmem:[%s2] sm:$0xff]
  %48 = vset.pattern.permute.xlu0 0
  %49 = vperm.xlu0 %48, %v46
  %v50 = vpop.permute.xlu0 %49
  %v52 = vadd.f32 %v44, %v50
  %v53 = vadd.f32 %v45, %v50
  %54 = vst [vmem:[%s3] sm:$0xff] %v52
  %55 = vst [vmem:[%s3 + $0x8] sm:$0xff] %v53
  // Predicated region
  $region14: #{spatial_layer_norm.1} parent=0 // pred_check
    _
  $region15: #{spatial_layer_norm.1} parent=0 // pred_check_branch
    %57 = sbr.rel (0) target = $region17
  $region16: #{spatial_layer_norm.1} parent=0 // pred_region
    _
  $region17: #{spatial_layer_norm.1} parent=0 // pred_fallthru
    _
  // Predicated region
  $region18: #{spatial_layer_norm.1} parent=0 // pred_check
    _
  $region19: #{spatial_layer_norm.1} parent=0 // pred_check_branch
    %59 = sbr.rel (0) target = $region21
  $region20: #{spatial_layer_norm.1} parent=0 // pred_region
    _
  $region21: #{spatial_layer_norm.1} parent=0 // pred_fallthru
    _

</llo_original>
